<compile_context>
chip_gen: v7x
topology: tpu7x:2x2x1
jax: 0.10.0
libtpu: 0.0.40
codegen_flags: <defaults>
</compile_context>

<pallas_src>
import math
import functools

import jax
import jax.numpy as jnp
from jax import lax
from jax.experimental import pallas as pl
from jax.experimental.pallas import tpu as pltpu


EMBEDDING_SIZE = 1024
WATERMARK_SIZE = 32
_NEG_INF = -1e30          # additive mask value; exp(-1e30 - max) == 0 exactly


# ----------------------------------------------------------------------------
# Pallas kernel: fused QKV projection + block-masked scaled-dot-product attn
# ----------------------------------------------------------------------------
def _attn_kernel(x_ref, wqkv_ref, bqkv_ref, bias_ref, o_ref, *, wsize):
    """One batch block (R = TB*N rows) per grid step.

    x_ref    : (R, E)    flattened (batch-block, seq) rows
    wqkv_ref : (E, 3W)   concatenated [Wq | Wk | Wv]   (resident across steps)
    bqkv_ref : (1, 3W)   concatenated [bq | bk | bv]   (resident across steps)
    bias_ref : (R, R)    block-diagonal 0 / -1e30 mask (resident across steps)
    o_ref    : (R, W)    attention output rows
    """
    x = x_ref[...]                                                # (R, E)

    # Fused Q/K/V projection: single MXU matmul, contraction K = E = 1024.
    qkv = jnp.dot(x, wqkv_ref[...],
                  preferred_element_type=jnp.float32) + bqkv_ref[...]
    q = qkv[:, 0 * wsize:1 * wsize]                               # (R, W)
    k = qkv[:, 1 * wsize:2 * wsize]                               # (R, W)
    v = qkv[:, 2 * wsize:3 * wsize]                               # (R, W)

    scale = 1.0 / math.sqrt(float(wsize))

    # All-pairs scores for the whole block in ONE matmul, contracting the W
    # axis of both operands directly (no explicit k.T materialization).
    s = lax.dot_general(q, k, (((1,), (1,)), ((), ())),
                        preferred_element_type=jnp.float32)        # (R, R)
    # Block-diagonal mask restores independent per-batch-element attention.
    s = s * scale + bias_ref[...]

    # Numerically-stable softmax; masked entries become exactly 0 after exp.
    s = s - jnp.max(s, axis=-1, keepdims=True)
    p = jnp.exp(s)
    denom = jnp.sum(p, axis=-1, keepdims=True)                     # (R, 1)

    out = jnp.dot(p, v, preferred_element_type=jnp.float32)        # (R, W)
    # Fold softmax normalization into the narrow output (R*W muls, not R*R).
    o_ref[...] = (out * (1.0 / denom)).astype(o_ref.dtype)


# ----------------------------------------------------------------------------
# Wrapper
# ----------------------------------------------------------------------------
@functools.partial(jax.jit, static_argnames=("watermark_size", "batch_block"))
def d_watermark_attn(x, wqkv, bqkv, *, watermark_size=WATERMARK_SIZE,
                     batch_block=64):
    """x: (B, N, E); wqkv: (E, 3W); bqkv: (1, 3W) or (3W,) -> (B, N, W)."""
    B, N, E = x.shape
    W = watermark_size
    W3 = wqkv.shape[1]

    # Batch-block size: TB=64 -> R=512 rows/step (full MXU rows, ~2 MiB x block,
    # fits every generation's default scoped VMEM with double buffering).
    TB = min(batch_block, B)
    n_steps = pl.cdiv(B, TB)
    Bp = n_steps * TB
    R = TB * N

    if Bp != B:                       # zero-pad ragged batch; sliced off below
        x = jnp.pad(x, ((0, Bp - B), (0, 0), (0, 0)))
    x2d = x.reshape(Bp * N, E)
    bqkv2d = bqkv.reshape(1, W3)

    # Block-diagonal additive bias (same for every grid step -> resident VMEM).
    rb = jnp.arange(R, dtype=jnp.int32) // N
    bias = jnp.where(rb[:, None] == rb[None, :], 0.0, _NEG_INF)
    bias = bias.astype(jnp.float32)

    kernel = functools.partial(_attn_kernel, wsize=W)
    out2d = pl.pallas_call(
        kernel,
        out_shape=jax.ShapeDtypeStruct((Bp * N, W), x.dtype),
        grid=(n_steps,),
        in_specs=[
            pl.BlockSpec((R, E), lambda i: (i, 0)),      # streamed activations
            pl.BlockSpec((E, W3), lambda i: (0, 0)),     # resident weights
            pl.BlockSpec((1, W3), lambda i: (0, 0)),     # resident bias
            pl.BlockSpec((R, R), lambda i: (0, 0)),      # resident attn mask
        ],
        out_specs=pl.BlockSpec((R, W), lambda i: (i, 0)),
        compiler_params=pltpu.CompilerParams(
            dimension_semantics=("parallel",),           # split steps over TCs
            vmem_limit_bytes=32 * 1024 * 1024,           # headroom, < v7x phys
        ),
    )(x2d, wqkv, bqkv2d, bias)

    return out2d.reshape(Bp, N, W)[:B]


# ----------------------------------------------------------------------------
# Pure-JAX reference (mirrors the PyTorch module) for correctness checks
# ----------------------------------------------------------------------------
def _reference(x, wq, bq, wk, bk, wv, bv, wsize):
    q = jnp.einsum("bne,ew->bnw", x, wq, precision="highest") + bq
    k = jnp.einsum("bne,ew->bnw", x, wk, precision="highest") + bk
    v = jnp.einsum("bne,ew->bnw", x, wv, precision="highest") + bv
    s = jnp.einsum("bnw,bmw->bnm", q, k, precision="highest") / math.sqrt(
        float(wsize))
    p = jax.nn.softmax(s, axis=-1)
    return jnp.einsum("bnm,bmw->bnw", p, v, precision="highest")


if __name__ == "__main__":
    key = jax.random.PRNGKey(0)
    kx, kw, kb, kx2 = jax.random.split(key, 4)

    B, N, E, WS = 2, 8, EMBEDDING_SIZE, WATERMARK_SIZE

    x = jax.random.normal(kx, (B, N, E), jnp.float32)

    # nn.Linear default init: U(-1/sqrt(in_features), 1/sqrt(in_features))
    bound = 1.0 / math.sqrt(float(E))
    kwq, kwk, kwv = jax.random.split(kw, 3)
    kbq, kbk, kbv = jax.random.split(kb, 3)
    wq = jax.random.uniform(kwq, (E, WS), jnp.float32, -bound, bound)
    wk = jax.random.uniform(kwk, (E, WS), jnp.float32, -bound, bound)
    wv = jax.random.uniform(kwv, (E, WS), jnp.float32, -bound, bound)
    bq = jax.random.uniform(kbq, (WS,), jnp.float32, -bound, bound)
    bk = jax.random.uniform(kbk, (WS,), jnp.float32, -bound, bound)
    bv = jax.random.uniform(kbv, (WS,), jnp.float32, -bound, bound)

    # Fuse the three projections into one (E, 3W) weight / (1, 3W) bias.
    wqkv = jnp.concatenate([wq, wk, wv], axis=1)              # (1024, 96)
    bqkv = jnp.concatenate([bq, bk, bv]).reshape(1, 3 * WS)   # (1, 96)

    # --- run 1: small batch (single grid step) ------------------------------
    out = d_watermark_attn(x, wqkv, bqkv, watermark_size=WS)
    jax.block_until_ready(out)
    assert out.shape == (B, N, WS)
    ref = _reference(x, wq, bq, wk, bk, wv, bv, WS)
    assert bool(jnp.all(jnp.isfinite(out)))
    err = float(jnp.max(jnp.abs(out - ref)))
    assert err < 1e-3, err

    # --- run 2: multi-step grid + ragged-batch padding path -----------------
    B2 = 5
    x2 = jax.random.normal(kx2, (B2, N, E), jnp.float32)
    out2 = d_watermark_attn(x2, wqkv, bqkv, watermark_size=WS, batch_block=2)
    jax.block_until_ready(out2)
    assert out2.shape == (B2, N, WS)
    ref2 = _reference(x2, wq, bq, wk, bk, wv, bv, WS)
    assert bool(jnp.all(jnp.isfinite(out2)))
    err2 = float(jnp.max(jnp.abs(out2 - ref2)))
    assert err2 < 1e-3, err2

    print("KERNEL_OK")
</pallas_src>

<mosaic_0001>
module attributes {stable_mosaic.version = 11 : i64} {
  func.func @_attn_kernel(%arg0: i32, %arg1: memref<16x1024xf32, #tpu.memory_space<vmem>>, %arg2: memref<1024x96xf32, #tpu.memory_space<vmem>>, %arg3: memref<1x96xf32, #tpu.memory_space<vmem>>, %arg4: memref<16x16xf32, #tpu.memory_space<vmem>>, %arg5: memref<16x32xf32, #tpu.memory_space<vmem>>) attributes {dimension_semantics = [#tpu.dimension_semantics<parallel>], iteration_bounds = array<i64: 1>, scalar_prefetch = 0 : i64, scratch_operands = 0 : i64, tpu.core_type = #tpu.core_type<tc>, window_params = [{transform_indices = @transform_0, window_bounds = array<i64: 16, 1024>}, {pipeline_mode = #tpu.pipeline_mode<synchronous>, transform_indices = @transform_1, window_bounds = array<i64: 1024, 96>}, {pipeline_mode = #tpu.pipeline_mode<synchronous>, transform_indices = @transform_2, window_bounds = array<i64: 1, 96>}, {pipeline_mode = #tpu.pipeline_mode<synchronous>, transform_indices = @transform_3, window_bounds = array<i64: 16, 16>}, {transform_indices = @transform_4, window_bounds = array<i64: 16, 32>}]} {
    %c0 = arith.constant 0 : index
    %c0_0 = arith.constant 0 : index
    %0 = vector.load %arg1[%c0, %c0_0] : memref<16x1024xf32, #tpu.memory_space<vmem>>, vector<16x1024xf32>
    %c0_1 = arith.constant 0 : index
    %c0_2 = arith.constant 0 : index
    %1 = vector.load %arg2[%c0_1, %c0_2] : memref<1024x96xf32, #tpu.memory_space<vmem>>, vector<1024x96xf32>
    %cst = arith.constant dense<0.000000e+00> : vector<16x96xf32>
    %2 = tpu.matmul %0, %1, %cst {dimension_numbers = #tpu.dot_dimension_numbers<[1], [0], [0], [1], [0, 0, 1, 1], [], []>} : vector<16x1024xf32>, vector<1024x96xf32>, vector<16x96xf32> -> vector<16x96xf32>
    %c0_3 = arith.constant 0 : index
    %c0_4 = arith.constant 0 : index
    %3 = vector.load %arg3[%c0_3, %c0_4] : memref<1x96xf32, #tpu.memory_space<vmem>>, vector<1x96xf32>
    %4 = vector.broadcast %3 : vector<1x96xf32> to vector<16x96xf32>
    %5 = arith.addf %2, %4 : vector<16x96xf32>
    %6 = vector.extract_strided_slice %5 {offsets = [0, 0], sizes = [16, 32], strides = [1, 1]} : vector<16x96xf32> to vector<16x32xf32>
    %7 = vector.extract_strided_slice %5 {offsets = [0, 32], sizes = [16, 32], strides = [1, 1]} : vector<16x96xf32> to vector<16x32xf32>
    %8 = vector.extract_strided_slice %5 {offsets = [0, 64], sizes = [16, 32], strides = [1, 1]} : vector<16x96xf32> to vector<16x32xf32>
    %cst_5 = arith.constant dense<0.000000e+00> : vector<16x16xf32>
    %9 = tpu.matmul %6, %7, %cst_5 {dimension_numbers = #tpu.dot_dimension_numbers<[1], [1], [0], [0], [0, 0, 1, 0], [], []>} : vector<16x32xf32>, vector<16x32xf32>, vector<16x16xf32> -> vector<16x16xf32>
    %cst_6 = arith.constant 0.176776692 : f32
    %10 = vector.broadcast %cst_6 : f32 to vector<16x16xf32>
    %11 = arith.mulf %9, %10 : vector<16x16xf32>
    %c0_7 = arith.constant 0 : index
    %c0_8 = arith.constant 0 : index
    %12 = vector.load %arg4[%c0_7, %c0_8] : memref<16x16xf32, #tpu.memory_space<vmem>>, vector<16x16xf32>
    %13 = arith.addf %11, %12 : vector<16x16xf32>
    %cst_9 = arith.constant dense<0xFF800000> : vector<16xf32>
    %14 = vector.multi_reduction <maximumf>, %13, %cst_9 [1] : vector<16x16xf32> to vector<16xf32>
    %15 = vector.shape_cast %14 : vector<16xf32> to vector<16x1xf32>
    %16 = vector.broadcast %15 : vector<16x1xf32> to vector<16x16xf32>
    %17 = arith.subf %13, %16 : vector<16x16xf32>
    %18 = math.exp %17 : vector<16x16xf32>
    %cst_10 = arith.constant dense<0.000000e+00> : vector<16xf32>
    %19 = vector.multi_reduction <add>, %18, %cst_10 [1] : vector<16x16xf32> to vector<16xf32>
    %20 = vector.shape_cast %19 : vector<16xf32> to vector<16x1xf32>
    %cst_11 = arith.constant dense<0.000000e+00> : vector<16x32xf32>
    %21 = tpu.matmul %18, %8, %cst_11 {dimension_numbers = #tpu.dot_dimension_numbers<[1], [0], [0], [1], [0, 0, 1, 1], [], []>} : vector<16x16xf32>, vector<16x32xf32>, vector<16x32xf32> -> vector<16x32xf32>
    %cst_12 = arith.constant 1.000000e+00 : f32
    %22 = vector.broadcast %cst_12 : f32 to vector<16x1xf32>
    %23 = arith.divf %22, %20 : vector<16x1xf32>
    %24 = vector.broadcast %23 : vector<16x1xf32> to vector<16x32xf32>
    %25 = arith.mulf %21, %24 : vector<16x32xf32>
    %c0_13 = arith.constant 0 : index
    %c0_14 = arith.constant 0 : index
    %26 = vector.load %arg5[%c0_13, %c0_14] : memref<16x32xf32, #tpu.memory_space<vmem>>, vector<16x32xf32>
    tpu.vector_store %arg5[%c0_13, %c0_14], %25 {strides = array<i32>} : memref<16x32xf32, #tpu.memory_space<vmem>>, vector<16x32xf32>,
    return
  }
  func.func @transform_0(%arg0: i32) -> (i32, i32) {
    %c0_i32 = arith.constant 0 : i32
    %c0_i32_0 = arith.constant 0 : i32
    return %arg0, %c0_i32 : i32, i32
  }
  func.func @transform_1(%arg0: i32) -> (i32, i32) {
    %c0_i32 = arith.constant 0 : i32
    %c0_i32_0 = arith.constant 0 : i32
    %c0_i32_1 = arith.constant 0 : i32
    return %c0_i32, %c0_i32_0 : i32, i32
  }
  func.func @transform_2(%arg0: i32) -> (i32, i32) {
    %c0_i32 = arith.constant 0 : i32
    %c0_i32_0 = arith.constant 0 : i32
    %c0_i32_1 = arith.constant 0 : i32
    return %c0_i32, %c0_i32_0 : i32, i32
  }
  func.func @transform_3(%arg0: i32) -> (i32, i32) {
    %c0_i32 = arith.constant 0 : i32
    %c0_i32_0 = arith.constant 0 : i32
    %c0_i32_1 = arith.constant 0 : i32
    return %c0_i32, %c0_i32_0 : i32, i32
  }
  func.func @transform_4(%arg0: i32) -> (i32, i32) {
    %c0_i32 = arith.constant 0 : i32
    %c0_i32_0 = arith.constant 0 : i32
    return %arg0, %c0_i32 : i32, i32
  }
}

</mosaic_0001>

<llo_original>
// kernel: d_watermark_attn.1
$region0: #{d_watermark_attn.1}
  #allocation0 [shape = 'u32[]', space=smem, size = 0x4, offset = 0x4, fixed_abs, tag = 'smem constant byte address 0x4 - core index']
  #allocation1 [shape = 'u32[144,128]{1,0:T(1,128)}', space=vmem, size = 0x12000, scoped, tag = 'internal scratch']
  %s0 = inlined_call_operand.vmem [shape: f32[16,1024], index: 0, kind: input, shape index: {}]
  %s1 = inlined_call_operand.vmem [shape: f32[1024,96], index: 1, kind: input, shape index: {}]
  %s2 = inlined_call_operand.vmem [shape: f32[1,96], index: 2, kind: input, shape index: {}]
  %s3 = inlined_call_operand.vmem [shape: f32[16,16], index: 3, kind: input, shape index: {}]
  %s4 = inlined_call_operand.hbm [shape: f32[16,32], index: 4, kind: output, shape index: {}]
  %s5 = sld [smem:[#allocation0]]
  $region26: #{d_watermark_attn.1} parent=0
    _
  %s7 = ssub.s32 1, %s5
  %s8 = scalar_select 0, %s7, %s5
  $region1: #{d_watermark_attn.1} parent=0
    #allocation2 [shape = 'u8[8192]{0}', space=vmem, size = 0x2000, scoped, tag = 'output window, operand 0, single buffered']
    #allocation3 [shape = 's32[1]{0}', space=sflag, size = 0x4, scoped, tag = 'scoped memory for d_watermark_attn.1']
    %9 = vsyncpa [#allocation3], 0
    // Predicated region
    $region2: #{d_watermark_attn.1} parent=1 // pred_check
      _
    $region3: #{d_watermark_attn.1} parent=1 // pred_check_branch
      %11 = sbr.rel (0) target = $region5
    $region4: #{d_watermark_attn.1} parent=1 // pred_region
      _
    $region5: #{d_watermark_attn.1} parent=1 // pred_fallthru
      _
    // Predicated region
    $region6: #{d_watermark_attn.1} parent=1 // pred_check
      _
    $region7: #{d_watermark_attn.1} parent=1 // pred_check_branch
      %13 = sbr.rel (0) target = $region9
    $region8: #{d_watermark_attn.1} parent=1 // pred_region
      _
    $region9: #{d_watermark_attn.1} parent=1 // pred_fallthru
      _
    // Predicated region
    $region10: #{d_watermark_attn.1} parent=1 // pred_check
      _
    $region11: #{d_watermark_attn.1} parent=1 // pred_check_branch
      %15 = sbr.rel (0) target = $region13
    $region12: #{d_watermark_attn.1} parent=1 // pred_region
      _
    $region13: #{d_watermark_attn.1} parent=1 // pred_fallthru
      _
    // Predicated region
    $region14: #{d_watermark_attn.1} parent=1 // pred_check
      _
    $region15: #{d_watermark_attn.1} parent=1 // pred_check_branch
      %17 = sbr.rel (0) target = $region17
    $region16: #{d_watermark_attn.1} parent=1 // pred_region
      _
    $region17: #{d_watermark_attn.1} parent=1 // pred_fallthru
      _
    %v18 = vld [vmem:[%s0] sm:$0xff]
    %v19 = vld [vmem:[%s0 + $0x8] sm:$0xff]
    %v20 = vld [vmem:[%s0 + $0x10] sm:$0xff]
    %v21 = vld [vmem:[%s0 + $0x18] sm:$0xff]
    %v22 = vld [vmem:[%s0 + $0x20] sm:$0xff]
    %v23 = vld [vmem:[%s0 + $0x28] sm:$0xff]
    %v24 = vld [vmem:[%s0 + $0x30] sm:$0xff]
    %v25 = vld [vmem:[%s0 + $0x38] sm:$0xff]
    %v26 = vld [vmem:[%s0 + $0x40] sm:$0xff]
    %v27 = vld [vmem:[%s0 + $0x48] sm:$0xff]
    %v28 = vld [vmem:[%s0 + $0x50] sm:$0xff]
    %v29 = vld [vmem:[%s0 + $0x58] sm:$0xff]
    %v30 = vld [vmem:[%s0 + $0x60] sm:$0xff]
    %v31 = vld [vmem:[%s0 + $0x68] sm:$0xff]
    %v32 = vld [vmem:[%s0 + $0x70] sm:$0xff]
    %v33 = vld [vmem:[%s0 + $0x78] sm:$0xff]
    %v34 = vld [vmem:[%s1] sm:$0xff]
    %v35 = vld [vmem:[%s1 + $0x8] sm:$0xff]
    %v36 = vld [vmem:[%s1 + $0x10] sm:$0xff]
    %v37 = vld [vmem:[%s1 + $0x18] sm:$0xff]
    %v38 = vld [vmem:[%s1 + $0x20] sm:$0xff]
    %v39 = vld [vmem:[%s1 + $0x28] sm:$0xff]
    %v40 = vld [vmem:[%s1 + $0x30] sm:$0xff]
    %v41 = vld [vmem:[%s1 + $0x38] sm:$0xff]
    %v42 = vld [vmem:[%s1 + $0x40] sm:$0xff]
    %v43 = vld [vmem:[%s1 + $0x48] sm:$0xff]
    %v44 = vld [vmem:[%s1 + $0x50] sm:$0xff]
    %v45 = vld [vmem:[%s1 + $0x58] sm:$0xff]
    %v46 = vld [vmem:[%s1 + $0x60] sm:$0xff]
    %v47 = vld [vmem:[%s1 + $0x68] sm:$0xff]
    %v48 = vld [vmem:[%s1 + $0x70] sm:$0xff]
    %v49 = vld [vmem:[%s1 + $0x78] sm:$0xff]
    %v50 = vld [vmem:[%s1 + $0x80] sm:$0xff]
    %v51 = vld [vmem:[%s1 + $0x88] sm:$0xff]
    %v52 = vld [vmem:[%s1 + $0x90] sm:$0xff]
    %v53 = vld [vmem:[%s1 + $0x98] sm:$0xff]
    %v54 = vld [vmem:[%s1 + $0xa0] sm:$0xff]
    %v55 = vld [vmem:[%s1 + $0xa8] sm:$0xff]
    %v56 = vld [vmem:[%s1 + $0xb0] sm:$0xff]
    %v57 = vld [vmem:[%s1 + $0xb8] sm:$0xff]
    %v58 = vld [vmem:[%s1 + $0xc0] sm:$0xff]
    %v59 = vld [vmem:[%s1 + $0xc8] sm:$0xff]
    %v60 = vld [vmem:[%s1 + $0xd0] sm:$0xff]
    %v61 = vld [vmem:[%s1 + $0xd8] sm:$0xff]
    %v62 = vld [vmem:[%s1 + $0xe0] sm:$0xff]
    %v63 = vld [vmem:[%s1 + $0xe8] sm:$0xff]
    %v64 = vld [vmem:[%s1 + $0xf0] sm:$0xff]
    %v65 = vld [vmem:[%s1 + $0xf8] sm:$0xff]
    %v66 = vld [vmem:[%s1 + $0x100] sm:$0xff]
    %v67 = vld [vmem:[%s1 + $0x108] sm:$0xff]
    %v68 = vld [vmem:[%s1 + $0x110] sm:$0xff]
    %v69 = vld [vmem:[%s1 + $0x118] sm:$0xff]
    %v70 = vld [vmem:[%s1 + $0x120] sm:$0xff]
    %v71 = vld [vmem:[%s1 + $0x128] sm:$0xff]
    %v72 = vld [vmem:[%s1 + $0x130] sm:$0xff]
    %v73 = vld [vmem:[%s1 + $0x138] sm:$0xff]
    %v74 = vld [vmem:[%s1 + $0x140] sm:$0xff]
    %v75 = vld [vmem:[%s1 + $0x148] sm:$0xff]
    %v76 = vld [vmem:[%s1 + $0x150] sm:$0xff]
    %v77 = vld [vmem:[%s1 + $0x158] sm:$0xff]
    %v78 = vld [vmem:[%s1 + $0x160] sm:$0xff]
    %v79 = vld [vmem:[%s1 + $0x168] sm:$0xff]
    %v80 = vld [vmem:[%s1 + $0x170] sm:$0xff]
    %v81 = vld [vmem:[%s1 + $0x178] sm:$0xff]
    %v82 = vld [vmem:[%s1 + $0x180] sm:$0xff]
    %v83 = vld [vmem:[%s1 + $0x188] sm:$0xff]
    %v84 = vld [vmem:[%s1 + $0x190] sm:$0xff]
    %v85 = vld [vmem:[%s1 + $0x198] sm:$0xff]
    %v86 = vld [vmem:[%s1 + $0x1a0] sm:$0xff]
    %v87 = vld [vmem:[%s1 + $0x1a8] sm:$0xff]
    %v88 = vld [vmem:[%s1 + $0x1b0] sm:$0xff]
    %v89 = vld [vmem:[%s1 + $0x1b8] sm:$0xff]
    %v90 = vld [vmem:[%s1 + $0x1c0] sm:$0xff]
    %v91 = vld [vmem:[%s1 + $0x1c8] sm:$0xff]
    %v92 = vld [vmem:[%s1 + $0x1d0] sm:$0xff]
    %v93 = vld [vmem:[%s1 + $0x1d8] sm:$0xff]
    %v94 = vld [vmem:[%s1 + $0x1e0] sm:$0xff]
    %v95 = vld [vmem:[%s1 + $0x1e8] sm:$0xff]
    %v96 = vld [vmem:[%s1 + $0x1f0] sm:$0xff]
    %v97 = vld [vmem:[%s1 + $0x1f8] sm:$0xff]
    %v98 = vld [vmem:[%s1 + $0x200] sm:$0xff]
    %v99 = vld [vmem:[%s1 + $0x208] sm:$0xff]
    %v100 = vld [vmem:[%s1 + $0x210] sm:$0xff]
    %v101 = vld [vmem:[%s1 + $0x218] sm:$0xff]
    %v102 = vld [vmem:[%s1 + $0x220] sm:$0xff]
    %v103 = vld [vmem:[%s1 + $0x228] sm:$0xff]
    %v104 = vld [vmem:[%s1 + $0x230] sm:$0xff]
    %v105 = vld [vmem:[%s1 + $0x238] sm:$0xff]
    %v106 = vld [vmem:[%s1 + $0x240] sm:$0xff]
    %v107 = vld [vmem:[%s1 + $0x248] sm:$0xff]
    %v108 = vld [vmem:[%s1 + $0x250] sm:$0xff]
    %v109 = vld [vmem:[%s1 + $0x258] sm:$0xff]
    %v110 = vld [vmem:[%s1 + $0x260] sm:$0xff]
    %v111 = vld [vmem:[%s1 + $0x268] sm:$0xff]
    %v112 = vld [vmem:[%s1 + $0x270] sm:$0xff]
    %v113 = vld [vmem:[%s1 + $0x278] sm:$0xff]
    %v114 = vld [vmem:[%s1 + $0x280] sm:$0xff]
    %v115 = vld [vmem:[%s1 + $0x288] sm:$0xff]
    %v116 = vld [vmem:[%s1 + $0x290] sm:$0xff]
    %v117 = vld [vmem:[%s1 + $0x298] sm:$0xff]
    %v118 = vld [vmem:[%s1 + $0x2a0] sm:$0xff]
    %v119 = vld [vmem:[%s1 + $0x2a8] sm:$0xff]
    %v120 = vld [vmem:[%s1 + $0x2b0] sm:$0xff]
    %v121 = vld [vmem:[%s1 + $0x2b8] sm:$0xff]
    %v122 = vld [vmem:[%s1 + $0x2c0] sm:$0xff]
    %v123 = vld [vmem:[%s1 + $0x2c8] sm:$0xff]
    %v124 = vld [vmem:[%s1 + $0x2d0] sm:$0xff]
    %v125 = vld [vmem:[%s1 + $0x2d8] sm:$0xff]
    %v126 = vld [vmem:[%s1 + $0x2e0] sm:$0xff]
    %v127 = vld [vmem:[%s1 + $0x2e8] sm:$0xff]
    %v128 = vld [vmem:[%s1 + $0x2f0] sm:$0xff]
    %v129 = vld [vmem:[%s1 + $0x2f8] sm:$0xff]
    %v130 = vld [vmem:[%s1 + $0x300] sm:$0xff]
    %v131 = vld [vmem:[%s1 + $0x308] sm:$0xff]
    %v132 = vld [vmem:[%s1 + $0x310] sm:$0xff]
    %v133 = vld [vmem:[%s1 + $0x318] sm:$0xff]
    %v134 = vld [vmem:[%s1 + $0x320] sm:$0xff]
    %v135 = vld [vmem:[%s1 + $0x328] sm:$0xff]
    %v136 = vld [vmem:[%s1 + $0x330] sm:$0xff]
    %v137 = vld [vmem:[%s1 + $0x338] sm:$0xff]
    %v138 = vld [vmem:[%s1 + $0x340] sm:$0xff]
    %v139 = vld [vmem:[%s1 + $0x348] sm:$0xff]
    %v140 = vld [vmem:[%s1 + $0x350] sm:$0xff]
    %v141 = vld [vmem:[%s1 + $0x358] sm:$0xff]
    %v142 = vld [vmem:[%s1 + $0x360] sm:$0xff]
    %v143 = vld [vmem:[%s1 + $0x368] sm:$0xff]
    %v144 = vld [vmem:[%s1 + $0x370] sm:$0xff]
    %v145 = vld [vmem:[%s1 + $0x378] sm:$0xff]
    %v146 = vld [vmem:[%s1 + $0x380] sm:$0xff]
    %v147 = vld [vmem:[%s1 + $0x388] sm:$0xff]
    %v148 = vld [vmem:[%s1 + $0x390] sm:$0xff]
    %v149 = vld [vmem:[%s1 + $0x398] sm:$0xff]
    %v150 = vld [vmem:[%s1 + $0x3a0] sm:$0xff]
    %v151 = vld [vmem:[%s1 + $0x3a8] sm:$0xff]
    %v152 = vld [vmem:[%s1 + $0x3b0] sm:$0xff]
    %v153 = vld [vmem:[%s1 + $0x3b8] sm:$0xff]
    %v154 = vld [vmem:[%s1 + $0x3c0] sm:$0xff]
    %v155 = vld [vmem:[%s1 + $0x3c8] sm:$0xff]
    %v156 = vld [vmem:[%s1 + $0x3d0] sm:$0xff]
    %v157 = vld [vmem:[%s1 + $0x3d8] sm:$0xff]
    %v158 = vld [vmem:[%s1 + $0x3e0] sm:$0xff]
    %v159 = vld [vmem:[%s1 + $0x3e8] sm:$0xff]
    %v160 = vld [vmem:[%s1 + $0x3f0] sm:$0xff]
    %v161 = vld [vmem:[%s1 + $0x3f8] sm:$0xff]
    %v162 = vld [vmem:[%s2] sm:$0x1]
    %v164 = vlaneseq
    %v165 = vshrl.u32 %v164, 7
    %v166 = vsub.s32 0, %v165
    %v167 = vrot.slane %v162, %v166
    %169 = vmatprep.subr.mxu0 0.0
    %170 = vmatpush1.msra.mxu0 %v34
    %171 = vmatprep.subr.mxu0 0.0
    %172 = vmatpush1.msra.mxu0 %v35
    %173 = vmatprep.subr.mxu0 0.0
    %174 = vmatpush1.msra.mxu0 %v36
    %175 = vmatprep.subr.mxu0 0.0
    %176 = vmatpush1.msra.mxu0 %v37
    %177 = vmatprep.subr.mxu0 0.0
    %178 = vmatpush1.msra.mxu0 %v38
    %179 = vmatprep.subr.mxu0 0.0
    %180 = vmatpush1.msra.mxu0 %v39
    %181 = vmatprep.subr.mxu0 0.0
    %182 = vmatpush1.msra.mxu0 %v40
    %183 = vmatprep.subr.mxu0 0.0
    %184 = vmatpush1.msra.mxu0 %v41
    %185 = vmatprep.subr.mxu0 0.0
    %186 = vmatpush1.msra.mxu0 %v42
    %187 = vmatprep.subr.mxu0 0.0
    %188 = vmatpush1.msra.mxu0 %v43
    %189 = vmatprep.subr.mxu0 0.0
    %190 = vmatpush1.msra.mxu0 %v44
    %191 = vmatprep.subr.mxu0 0.0
    %192 = vmatpush1.msra.mxu0 %v45
    %193 = vmatprep.subr.mxu0 0.0
    %194 = vmatpush1.msra.mxu0 %v46
    %195 = vmatprep.subr.mxu0 0.0
    %196 = vmatpush1.msra.mxu0 %v47
    %197 = vmatprep.subr.mxu0 0.0
    %198 = vmatpush1.msra.mxu0 %v48
    %199 = vmatprep.subr.mxu0 0.0
    %200 = vmatpush1.msra.mxu0 %v49
    %201 = vmatprep.subr.mxu0 0.0
    %202 = vmatpush1.msra.mxu0 %v50
    %203 = vmatprep.subr.mxu0 0.0
    %204 = vmatpush1.msra.mxu0 %v51
    %205 = vmatprep.subr.mxu0 0.0
    %206 = vmatpush1.msra.mxu0 %v52
    %207 = vmatprep.subr.mxu0 0.0
    %208 = vmatpush1.msra.mxu0 %v53
    %209 = vmatprep.subr.mxu0 0.0
    %210 = vmatpush1.msra.mxu0 %v54
    %211 = vmatprep.subr.mxu0 0.0
    %212 = vmatpush1.msra.mxu0 %v55
    %213 = vmatprep.subr.mxu0 0.0
    %214 = vmatpush1.msra.mxu0 %v56
    %215 = vmatprep.subr.mxu0 0.0
    %216 = vmatpush1.msra.mxu0 %v57
    %217 = vmatprep.subr.mxu0 0.0
    %218 = vmatpush1.msra.mxu0 %v58
    %219 = vmatprep.subr.mxu0 0.0
    %220 = vmatpush1.msra.mxu0 %v59
    %221 = vmatprep.subr.mxu0 0.0
    %222 = vmatpush1.msra.mxu0 %v60
    %223 = vmatprep.subr.mxu0 0.0
    %224 = vmatpush1.msra.mxu0 %v61
    %225 = vmatprep.subr.mxu0 0.0
    %226 = vmatpush1.msra.mxu0 %v62
    %227 = vmatprep.subr.mxu0 0.0
    %228 = vmatpush1.msra.mxu0 %v63
    %229 = vmatprep.subr.mxu0 0.0
    %230 = vmatpush1.msra.mxu0 %v64
    %231 = vmatprep.subr.mxu0 0.0
    %232 = vmatpush1.msra.mxu0 %v65
    %233 = vmatprep.mubr.f32.mxu0 %v19
    %234 = vmatmul.mubr.f32.gmra.mrb[0].mxu0 %v18
    %v235 = vpop.f32.mrb[0].mxu0
    %v236 = vadd.f32 %v167, %v235
    %v237 = vpop.f32.mrb[0].mxu0
    %238 = vmatprep.mubr.f32.mxu0 %v27
    %239 = vmatmul.mubr.f32.gmra.mrb[0].mxu0 %v26
    %v240 = vpop.f32.mrb[0].mxu0
    %v241 = vadd.f32 %v167, %v240
    %v242 = vpop.f32.mrb[0].mxu0
    %243 = vdwg.mxu0
    %244 = vmatprep.subr.mxu0 0.0
    %245 = vmatpush1.msra.mxu0 %v66
    %246 = vmatprep.subr.mxu0 0.0
    %247 = vmatpush1.msra.mxu0 %v67
    %248 = vmatprep.subr.mxu0 0.0
    %249 = vmatpush1.msra.mxu0 %v68
    %250 = vmatprep.subr.mxu0 0.0
    %251 = vmatpush1.msra.mxu0 %v69
    %252 = vmatprep.subr.mxu0 0.0
    %253 = vmatpush1.msra.mxu0 %v70
    %254 = vmatprep.subr.mxu0 0.0
    %255 = vmatpush1.msra.mxu0 %v71
    %256 = vmatprep.subr.mxu0 0.0
    %257 = vmatpush1.msra.mxu0 %v72
    %258 = vmatprep.subr.mxu0 0.0
    %259 = vmatpush1.msra.mxu0 %v73
    %260 = vmatprep.subr.mxu0 0.0
    %261 = vmatpush1.msra.mxu0 %v74
    %262 = vmatprep.subr.mxu0 0.0
    %263 = vmatpush1.msra.mxu0 %v75
    %264 = vmatprep.subr.mxu0 0.0
    %265 = vmatpush1.msra.mxu0 %v76
    %266 = vmatprep.subr.mxu0 0.0
    %267 = vmatpush1.msra.mxu0 %v77
    %268 = vmatprep.subr.mxu0 0.0
    %269 = vmatpush1.msra.mxu0 %v78
    %270 = vmatprep.subr.mxu0 0.0
    %271 = vmatpush1.msra.mxu0 %v79
    %272 = vmatprep.subr.mxu0 0.0
    %273 = vmatpush1.msra.mxu0 %v80
    %274 = vmatprep.subr.mxu0 0.0
    %275 = vmatpush1.msra.mxu0 %v81
    %276 = vmatprep.subr.mxu0 0.0
    %277 = vmatpush1.msra.mxu0 %v82
    %278 = vmatprep.subr.mxu0 0.0
    %279 = vmatpush1.msra.mxu0 %v83
    %280 = vmatprep.subr.mxu0 0.0
    %281 = vmatpush1.msra.mxu0 %v84
    %282 = vmatprep.subr.mxu0 0.0
    %283 = vmatpush1.msra.mxu0 %v85
    %284 = vmatprep.subr.mxu0 0.0
    %285 = vmatpush1.msra.mxu0 %v86
    %286 = vmatprep.subr.mxu0 0.0
    %287 = vmatpush1.msra.mxu0 %v87
    %288 = vmatprep.subr.mxu0 0.0
    %289 = vmatpush1.msra.mxu0 %v88
    %290 = vmatprep.subr.mxu0 0.0
    %291 = vmatpush1.msra.mxu0 %v89
    %292 = vmatprep.subr.mxu0 0.0
    %293 = vmatpush1.msra.mxu0 %v90
    %294 = vmatprep.subr.mxu0 0.0
    %295 = vmatpush1.msra.mxu0 %v91
    %296 = vmatprep.subr.mxu0 0.0
    %297 = vmatpush1.msra.mxu0 %v92
    %298 = vmatprep.subr.mxu0 0.0
    %299 = vmatpush1.msra.mxu0 %v93
    %300 = vmatprep.subr.mxu0 0.0
    %301 = vmatpush1.msra.mxu0 %v94
    %302 = vmatprep.subr.mxu0 0.0
    %303 = vmatpush1.msra.mxu0 %v95
    %304 = vmatprep.subr.mxu0 0.0
    %305 = vmatpush1.msra.mxu0 %v96
    %306 = vmatprep.subr.mxu0 0.0
    %307 = vmatpush1.msra.mxu0 %v97
    %308 = vmatprep.mubr.f32.mxu0 %v21
    %309 = vmatmul.mubr.f32.gmra.mrb[0].mxu0 %v20
    %v310 = vpop.f32.mrb[0].mxu0
    %v311 = vadd.f32 %v236, %v310
    %v312 = vpop.f32.mrb[0].mxu0
    %313 = vmatprep.mubr.f32.mxu0 %v29
    %314 = vmatmul.mubr.f32.gmra.mrb[0].mxu0 %v28
    %v315 = vpop.f32.mrb[0].mxu0
    %v316 = vadd.f32 %v241, %v315
    %v317 = vpop.f32.mrb[0].mxu0
    %318 = vdwg.mxu0
    %319 = vmatprep.subr.mxu0 0.0
    %320 = vmatpush1.msra.mxu0 %v98
    %321 = vmatprep.subr.mxu0 0.0
    %322 = vmatpush1.msra.mxu0 %v99
    %323 = vmatprep.subr.mxu0 0.0
    %324 = vmatpush1.msra.mxu0 %v100
    %325 = vmatprep.subr.mxu0 0.0
    %326 = vmatpush1.msra.mxu0 %v101
    %327 = vmatprep.subr.mxu0 0.0
    %328 = vmatpush1.msra.mxu0 %v102
    %329 = vmatprep.subr.mxu0 0.0
    %330 = vmatpush1.msra.mxu0 %v103
    %331 = vmatprep.subr.mxu0 0.0
    %332 = vmatpush1.msra.mxu0 %v104
    %333 = vmatprep.subr.mxu0 0.0
    %334 = vmatpush1.msra.mxu0 %v105
    %335 = vmatprep.subr.mxu0 0.0
    %336 = vmatpush1.msra.mxu0 %v106
    %337 = vmatprep.subr.mxu0 0.0
    %338 = vmatpush1.msra.mxu0 %v107
    %339 = vmatprep.subr.mxu0 0.0
    %340 = vmatpush1.msra.mxu0 %v108
    %341 = vmatprep.subr.mxu0 0.0
    %342 = vmatpush1.msra.mxu0 %v109
    %343 = vmatprep.subr.mxu0 0.0
    %344 = vmatpush1.msra.mxu0 %v110
    %345 = vmatprep.subr.mxu0 0.0
    %346 = vmatpush1.msra.mxu0 %v111
    %347 = vmatprep.subr.mxu0 0.0
    %348 = vmatpush1.msra.mxu0 %v112
    %349 = vmatprep.subr.mxu0 0.0
    %350 = vmatpush1.msra.mxu0 %v113
    %351 = vmatprep.subr.mxu0 0.0
    %352 = vmatpush1.msra.mxu0 %v114
    %353 = vmatprep.subr.mxu0 0.0
    %354 = vmatpush1.msra.mxu0 %v115
    %355 = vmatprep.subr.mxu0 0.0
    %356 = vmatpush1.msra.mxu0 %v116
    %357 = vmatprep.subr.mxu0 0.0
    %358 = vmatpush1.msra.mxu0 %v117
    %359 = vmatprep.subr.mxu0 0.0
    %360 = vmatpush1.msra.mxu0 %v118
    %361 = vmatprep.subr.mxu0 0.0
    %362 = vmatpush1.msra.mxu0 %v119
    %363 = vmatprep.subr.mxu0 0.0
    %364 = vmatpush1.msra.mxu0 %v120
    %365 = vmatprep.subr.mxu0 0.0
    %366 = vmatpush1.msra.mxu0 %v121
    %367 = vmatprep.subr.mxu0 0.0
    %368 = vmatpush1.msra.mxu0 %v122
    %369 = vmatprep.subr.mxu0 0.0
    %370 = vmatpush1.msra.mxu0 %v123
    %371 = vmatprep.subr.mxu0 0.0
    %372 = vmatpush1.msra.mxu0 %v124
    %373 = vmatprep.subr.mxu0 0.0
    %374 = vmatpush1.msra.mxu0 %v125
    %375 = vmatprep.subr.mxu0 0.0
    %376 = vmatpush1.msra.mxu0 %v126
    %377 = vmatprep.subr.mxu0 0.0
    %378 = vmatpush1.msra.mxu0 %v127
    %379 = vmatprep.subr.mxu0 0.0
    %380 = vmatpush1.msra.mxu0 %v128
    %381 = vmatprep.subr.mxu0 0.0
    %382 = vmatpush1.msra.mxu0 %v129
    %383 = vmatprep.mubr.f32.mxu0 %v23
    %384 = vmatmul.mubr.f32.gmra.mrb[0].mxu0 %v22
    %v385 = vpop.f32.mrb[0].mxu0
    %v386 = vadd.f32 %v311, %v385
    %v387 = vpop.f32.mrb[0].mxu0
    %388 = vmatprep.mubr.f32.mxu0 %v31
    %389 = vmatmul.mubr.f32.gmra.mrb[0].mxu0 %v30
    %v390 = vpop.f32.mrb[0].mxu0
    %v391 = vadd.f32 %v316, %v390
    %v392 = vpop.f32.mrb[0].mxu0
    %393 = vdwg.mxu0
    %394 = vmatprep.subr.mxu0 0.0
    %395 = vmatpush1.msra.mxu0 %v130
    %396 = vmatprep.subr.mxu0 0.0
    %397 = vmatpush1.msra.mxu0 %v131
    %398 = vmatprep.subr.mxu0 0.0
    %399 = vmatpush1.msra.mxu0 %v132
    %400 = vmatprep.subr.mxu0 0.0
    %401 = vmatpush1.msra.mxu0 %v133
    %402 = vmatprep.subr.mxu0 0.0
    %403 = vmatpush1.msra.mxu0 %v134
    %404 = vmatprep.subr.mxu0 0.0
    %405 = vmatpush1.msra.mxu0 %v135
    %406 = vmatprep.subr.mxu0 0.0
    %407 = vmatpush1.msra.mxu0 %v136
    %408 = vmatprep.subr.mxu0 0.0
    %409 = vmatpush1.msra.mxu0 %v137
    %410 = vmatprep.subr.mxu0 0.0
    %411 = vmatpush1.msra.mxu0 %v138
    %412 = vmatprep.subr.mxu0 0.0
    %413 = vmatpush1.msra.mxu0 %v139
    %414 = vmatprep.subr.mxu0 0.0
    %415 = vmatpush1.msra.mxu0 %v140
    %416 = vmatprep.subr.mxu0 0.0
    %417 = vmatpush1.msra.mxu0 %v141
    %418 = vmatprep.subr.mxu0 0.0
    %419 = vmatpush1.msra.mxu0 %v142
    %420 = vmatprep.subr.mxu0 0.0
    %421 = vmatpush1.msra.mxu0 %v143
    %422 = vmatprep.subr.mxu0 0.0
    %423 = vmatpush1.msra.mxu0 %v144
    %424 = vmatprep.subr.mxu0 0.0
    %425 = vmatpush1.msra.mxu0 %v145
    %426 = vmatprep.subr.mxu0 0.0
    %427 = vmatpush1.msra.mxu0 %v146
    %428 = vmatprep.subr.mxu0 0.0
    %429 = vmatpush1.msra.mxu0 %v147
    %430 = vmatprep.subr.mxu0 0.0
    %431 = vmatpush1.msra.mxu0 %v148
    %432 = vmatprep.subr.mxu0 0.0
    %433 = vmatpush1.msra.mxu0 %v149
    %434 = vmatprep.subr.mxu0 0.0
    %435 = vmatpush1.msra.mxu0 %v150
    %436 = vmatprep.subr.mxu0 0.0
    %437 = vmatpush1.msra.mxu0 %v151
    %438 = vmatprep.subr.mxu0 0.0
    %439 = vmatpush1.msra.mxu0 %v152
    %440 = vmatprep.subr.mxu0 0.0
    %441 = vmatpush1.msra.mxu0 %v153
    %442 = vmatprep.subr.mxu0 0.0
    %443 = vmatpush1.msra.mxu0 %v154
    %444 = vmatprep.subr.mxu0 0.0
    %445 = vmatpush1.msra.mxu0 %v155
    %446 = vmatprep.subr.mxu0 0.0
    %447 = vmatpush1.msra.mxu0 %v156
    %448 = vmatprep.subr.mxu0 0.0
    %449 = vmatpush1.msra.mxu0 %v157
    %450 = vmatprep.subr.mxu0 0.0
    %451 = vmatpush1.msra.mxu0 %v158
    %452 = vmatprep.subr.mxu0 0.0
    %453 = vmatpush1.msra.mxu0 %v159
    %454 = vmatprep.subr.mxu0 0.0
    %455 = vmatpush1.msra.mxu0 %v160
    %456 = vmatprep.subr.mxu0 0.0
    %457 = vmatpush1.msra.mxu0 %v161
    %458 = vmatprep.mubr.f32.mxu0 %v25
    %459 = vmatmul.mubr.f32.gmra.mrb[0].mxu0 %v24
    %v460 = vpop.f32.mrb[0].mxu0
    %v461 = vadd.f32 %v386, %v460
    %v462 = vpop.f32.mrb[0].mxu0
    %463 = vmatprep.mubr.f32.mxu0 %v33
    %464 = vmatmul.mubr.f32.gmra.mrb[0].mxu0 %v32
    %v465 = vpop.f32.mrb[0].mxu0
    %v466 = vadd.f32 %v391, %v465
    %v467 = vpop.f32.mrb[0].mxu0
    %468 = vdwg.mxu0
    %471 = vrot.lane.b32.xlu0 %v461, 96
    %v472 = vpop.permute.xlu0 %471
    %473 = vrot.lane.b32.xlu0 %v466, 96
    %v474 = vpop.permute.xlu0 %473
    %vm475 = vcmask 261120
    %v476 = vsel %vm475, %v461, 0
    %v478 = vsel %vm475, %v466, 0
    %v480 = vsel %vm475, %v472, 0
    %v482 = vsel %vm475, %v474, 0
    %484 = vmatprep.subr.mxu0 0.0
    %485 = vmatpush1.xpose.msra.mxu0 %v480
    %486 = vmatprep.subr.mxu0 0.0
    %487 = vmatpush1.xpose.msra.mxu0 %v482
    %488 = vmatprep.subr.mxu0 0.0
    %489 = vmatpush1.xpose.msra.mxu0 0.0
    %490 = vmatprep.subr.mxu0 0.0
    %491 = vmatpush1.xpose.msra.mxu0 0.0
    %492 = vmatprep.subr.mxu0 0.0
    %493 = vmatpush1.xpose.msra.mxu0 0.0
    %494 = vmatprep.subr.mxu0 0.0
    %495 = vmatpush1.xpose.msra.mxu0 0.0
    %496 = vmatprep.subr.mxu0 0.0
    %497 = vmatpush1.xpose.msra.mxu0 0.0
    %498 = vmatprep.subr.mxu0 0.0
    %499 = vmatpush1.xpose.msra.mxu0 0.0
    %500 = vmatprep.subr.mxu0 0.0
    %501 = vmatpush1.xpose.msra.mxu0 0.0
    %502 = vmatprep.subr.mxu0 0.0
    %503 = vmatpush1.xpose.msra.mxu0 0.0
    %504 = vmatprep.subr.mxu0 0.0
    %505 = vmatpush1.xpose.msra.mxu0 0.0
    %506 = vmatprep.subr.mxu0 0.0
    %507 = vmatpush1.xpose.msra.mxu0 0.0
    %508 = vmatprep.subr.mxu0 0.0
    %509 = vmatpush1.xpose.msra.mxu0 0.0
    %510 = vmatprep.subr.mxu0 0.0
    %511 = vmatpush1.xpose.msra.mxu0 0.0
    %512 = vmatprep.subr.mxu0 0.0
    %513 = vmatpush1.xpose.msra.mxu0 0.0
    %514 = vmatprep.subr.mxu0 0.0
    %515 = vmatpush1.xpose.msra.mxu0 0.0
    %516 = vmatprep.subr.mxu0 0.0
    %517 = vmatpush1.xpose.msra.mxu0 0.0
    %518 = vmatprep.subr.mxu0 0.0
    %519 = vmatpush1.xpose.msra.mxu0 0.0
    %520 = vmatprep.subr.mxu0 0.0
    %521 = vmatpush1.xpose.msra.mxu0 0.0
    %522 = vmatprep.subr.mxu0 0.0
    %523 = vmatpush1.xpose.msra.mxu0 0.0
    %524 = vmatprep.subr.mxu0 0.0
    %525 = vmatpush1.xpose.msra.mxu0 0.0
    %526 = vmatprep.subr.mxu0 0.0
    %527 = vmatpush1.xpose.msra.mxu0 0.0
    %528 = vmatprep.subr.mxu0 0.0
    %529 = vmatpush1.xpose.msra.mxu0 0.0
    %530 = vmatprep.subr.mxu0 0.0
    %531 = vmatpush1.xpose.msra.mxu0 0.0
    %532 = vmatprep.subr.mxu0 0.0
    %533 = vmatpush1.xpose.msra.mxu0 0.0
    %534 = vmatprep.subr.mxu0 0.0
    %535 = vmatpush1.xpose.msra.mxu0 0.0
    %536 = vmatprep.subr.mxu0 0.0
    %537 = vmatpush1.xpose.msra.mxu0 0.0
    %538 = vmatprep.subr.mxu0 0.0
    %539 = vmatpush1.xpose.msra.mxu0 0.0
    %540 = vmatprep.subr.mxu0 0.0
    %541 = vmatpush1.xpose.msra.mxu0 0.0
    %542 = vmatprep.subr.mxu0 0.0
    %543 = vmatpush1.xpose.msra.mxu0 0.0
    %544 = vmatprep.subr.mxu0 0.0
    %545 = vmatpush1.xpose.msra.mxu0 0.0
    %546 = vmatprep.subr.mxu0 0.0
    %547 = vmatpush1.xpose.msra.mxu0 0.0
    %548 = vmatprep.mubr.f32.mxu0 0.0
    %549 = vmatmul.mubr.f32.gmra.mrb[0].mxu0 %v476
    %v550 = vpop.f32.mrb[0].mxu0
    %v551 = vadd.f32 0.0, %v550
    %v552 = vpop.f32.mrb[0].mxu0
    %553 = vmatprep.mubr.f32.mxu0 0.0
    %554 = vmatmul.mubr.f32.gmra.mrb[0].mxu0 %v478
    %v555 = vpop.f32.mrb[0].mxu0
    %v556 = vadd.f32 0.0, %v555
    %v557 = vpop.f32.mrb[0].mxu0
    %558 = vdwg.mxu0
    %v559 = vmul.f32 %v551, 0.17677669
    %v560 = vmul.f32 %v556, 0.17677669
    %v561 = vld [vmem:[%s3] sm:$0xff]
    %v562 = vld [vmem:[%s3 + $0x8] sm:$0xff]
    %v563 = vadd.f32 %v559, %v561
    %v564 = vadd.f32 %v560, %v562
    %vm565 = vcmask 130048
    %v566 = vsel %vm565, %v563, -inf
    %567 = vmax.xlane.f32.xlu0 %v566
    %v568 = vpop.xlane.xlu0 %567
    %v569 = vsel %vm565, %v564, -inf
    %570 = vmax.xlane.f32.xlu0 %v569
    %v571 = vpop.xlane.xlu0 %570
    %v572 = vsub.f32 %v563, %v568
    %v573 = vsub.f32 %v564, %v571
    %v574 = vmul.f32 %v572, 1.442695
    %v575 = vpow.pop %v574
    %v576 = vmul.f32 %v573, 1.442695
    %v577 = vpow.pop %v576
    %v578 = vsel %vm565, %v575, 0.0
    %579 = vadd.xlane.f32.xlu0 %v578
    %v580 = vpop.xlane.xlu0 %579
    %v581 = vsel %vm565, %v577, 0.0
    %582 = vadd.xlane.f32.xlu0 %v581
    %v583 = vpop.xlane.xlu0 %582
    %584 = vrot.lane.b32.xlu0 %v461, 64
    %v585 = vpop.permute.xlu0 %584
    %586 = vrot.lane.b32.xlu0 %v466, 64
    %v587 = vpop.permute.xlu0 %586
    %v591 = vsel %vm565, %v575, 0
    %v594 = vsel %vm565, %v577, 0
    %596 = vmatprep.subr.mxu0 0.0
    %597 = vmatpush1.msra.mxu0 %v585
    %598 = vmatprep.subr.mxu0 0.0
    %599 = vmatpush1.msra.mxu0 %v587
    %600 = vmatprep.subr.mxu0 0.0
    %601 = vmatpush1.msra.mxu0 0.0
    %602 = vmatprep.subr.mxu0 0.0
    %603 = vmatpush1.msra.mxu0 0.0
    %604 = vmatprep.subr.mxu0 0.0
    %605 = vmatpush1.msra.mxu0 0.0
    %606 = vmatprep.subr.mxu0 0.0
    %607 = vmatpush1.msra.mxu0 0.0
    %608 = vmatprep.subr.mxu0 0.0
    %609 = vmatpush1.msra.mxu0 0.0
    %610 = vmatprep.subr.mxu0 0.0
    %611 = vmatpush1.msra.mxu0 0.0
    %612 = vmatprep.subr.mxu0 0.0
    %613 = vmatpush1.msra.mxu0 0.0
    %614 = vmatprep.subr.mxu0 0.0
    %615 = vmatpush1.msra.mxu0 0.0
    %616 = vmatprep.subr.mxu0 0.0
    %617 = vmatpush1.msra.mxu0 0.0
    %618 = vmatprep.subr.mxu0 0.0
    %619 = vmatpush1.msra.mxu0 0.0
    %620 = vmatprep.subr.mxu0 0.0
    %621 = vmatpush1.msra.mxu0 0.0
    %622 = vmatprep.subr.mxu0 0.0
    %623 = vmatpush1.msra.mxu0 0.0
    %624 = vmatprep.subr.mxu0 0.0
    %625 = vmatpush1.msra.mxu0 0.0
    %626 = vmatprep.subr.mxu0 0.0
    %627 = vmatpush1.msra.mxu0 0.0
    %628 = vmatprep.subr.mxu0 0.0
    %629 = vmatpush1.msra.mxu0 0.0
    %630 = vmatprep.subr.mxu0 0.0
    %631 = vmatpush1.msra.mxu0 0.0
    %632 = vmatprep.subr.mxu0 0.0
    %633 = vmatpush1.msra.mxu0 0.0
    %634 = vmatprep.subr.mxu0 0.0
    %635 = vmatpush1.msra.mxu0 0.0
    %636 = vmatprep.subr.mxu0 0.0
    %637 = vmatpush1.msra.mxu0 0.0
    %638 = vmatprep.subr.mxu0 0.0
    %639 = vmatpush1.msra.mxu0 0.0
    %640 = vmatprep.subr.mxu0 0.0
    %641 = vmatpush1.msra.mxu0 0.0
    %642 = vmatprep.subr.mxu0 0.0
    %643 = vmatpush1.msra.mxu0 0.0
    %644 = vmatprep.subr.mxu0 0.0
    %645 = vmatpush1.msra.mxu0 0.0
    %646 = vmatprep.subr.mxu0 0.0
    %647 = vmatpush1.msra.mxu0 0.0
    %648 = vmatprep.subr.mxu0 0.0
    %649 = vmatpush1.msra.mxu0 0.0
    %650 = vmatprep.subr.mxu0 0.0
    %651 = vmatpush1.msra.mxu0 0.0
    %652 = vmatprep.subr.mxu0 0.0
    %653 = vmatpush1.msra.mxu0 0.0
    %654 = vmatprep.subr.mxu0 0.0
    %655 = vmatpush1.msra.mxu0 0.0
    %656 = vmatprep.subr.mxu0 0.0
    %657 = vmatpush1.msra.mxu0 0.0
    %658 = vmatprep.subr.mxu0 0.0
    %659 = vmatpush1.msra.mxu0 0.0
    %660 = vmatprep.mubr.f32.mxu0 0.0
    %661 = vmatmul.mubr.f32.gmra.mrb[0].mxu0 %v591
    %v662 = vpop.f32.mrb[0].mxu0
    %v663 = vadd.f32 0.0, %v662
    %v664 = vpop.f32.mrb[0].mxu0
    %665 = vmatprep.mubr.f32.mxu0 0.0
    %666 = vmatmul.mubr.f32.gmra.mrb[0].mxu0 %v594
    %v667 = vpop.f32.mrb[0].mxu0
    %v668 = vadd.f32 0.0, %v667
    %v669 = vpop.f32.mrb[0].mxu0
    %670 = vdwg.mxu0
    %v671 = vrcp.pop %v580
    %v672 = vmul.f32 1.0, %v671
    %v673 = vrcp.pop %v583
    %v674 = vmul.f32 1.0, %v673
    %v675 = vmul.f32 %v663, %v672
    %v676 = vmul.f32 %v668, %v674
    %677 = vst.msk [vmem:[#allocation2] sm:$0xff] %vm475, %v675
    %678 = vst.msk [vmem:[#allocation2 + $0x8] sm:$0xff] %vm475, %v676
    // Predicated region
    $region18: #{d_watermark_attn.1} parent=1 // pred_check
      _
    $region19: #{d_watermark_attn.1} parent=1 // pred_check_branch
      %680 = sbr.rel (0) target = $region21
    $region20: #{d_watermark_attn.1} parent=1 // pred_region
      %s682 = ssub.s32 256, 256
      %683 = vsyncadd [#allocation3], %s682
      %s684 = sshll.u32 [#allocation2], 4
      %s685 = int_to_ptr.vmem [resolvable:$true] %s684
      %690 = dma.vmem_to_hbm [thread:$0]  %s685, 256, %s4, [#allocation3], 128, 128, 8
    $region21: #{d_watermark_attn.1} parent=1 // pred_fallthru
      _
    // Predicated region
    $region22: #{d_watermark_attn.1} parent=1 // pred_check
      _
    $region23: #{d_watermark_attn.1} parent=1 // pred_check_branch
      %692 = sbr.rel (0) target = $region25
    $region24: #{d_watermark_attn.1} parent=1 // pred_region
      %693 = dma.done [#allocation3], 256
    $region25: #{d_watermark_attn.1} parent=1 // pred_fallthru
      _
    %694 = vsyncpa [#allocation3], 1

</llo_original>
